<compile_context>
chip_gen: v7x
topology: tpu7x:2x2x1
jax: 0.10.0
libtpu: 0.0.40
codegen_flags: <defaults>
</compile_context>

<pallas_src>
import math

import jax
import jax.numpy as jnp
from jax.experimental import pallas as pl
from jax.experimental.pallas import tpu as pltpu


def _gelu_exact(x):
    # Matches torch.nn.functional.gelu default (erf-based, not tanh approx).
    return 0.5 * x * (1.0 + jax.lax.erf(x * (1.0 / math.sqrt(2.0))))


def _round_up(n, m):
    return ((n + m - 1) // m) * m


def _ff_kernel(x_ref, w1a_ref, w1g_ref, b1a_ref, b1g_ref, w2_ref, b2_ref,
               o_ref, acc_ref):
    # x_ref:   (tile_m, dim)
    # w1a_ref: (dim, tile_h)   columns [:hidden] of W1 (chunked)
    # w1g_ref: (dim, tile_h)   columns [hidden:] of W1 (chunked)
    # b1a_ref: (1, tile_h)     b1[:hidden] chunk
    # b1g_ref: (1, tile_h)     b1[hidden:] chunk
    # w2_ref:  (tile_h, dim)   W2 row chunk
    # b2_ref:  (1, dim)
    # o_ref:   (tile_m, dim)
    # acc_ref: (tile_m, dim) f32 scratch accumulator
    h = pl.program_id(1)

    @pl.when(h == 0)
    def _():
        acc_ref[...] = jnp.zeros_like(acc_ref)

    x = x_ref[...]  # native dtype -> full MXU rate, f32 accumulate via preferred_element_type
    a = jnp.dot(x, w1a_ref[...], preferred_element_type=jnp.float32)
    g = jnp.dot(x, w1g_ref[...], preferred_element_type=jnp.float32)
    a = a + b1a_ref[...].astype(jnp.float32)
    g = g + b1g_ref[...].astype(jnp.float32)
    y = a * _gelu_exact(g)

    acc_ref[...] += jnp.dot(y.astype(w2_ref.dtype), w2_ref[...],
                            preferred_element_type=jnp.float32)

    @pl.when(h == pl.num_programs(1) - 1)
    def _():
        o_ref[...] = (acc_ref[...] + b2_ref[...].astype(jnp.float32)).astype(o_ref.dtype)


def feedforward(x2d, w1, b1, w2, b2, *, tile_m=256, tile_h=512):
    """x2d: [N, dim] (batch*seq already flattened). Returns [N, dim]."""
    N, dim = x2d.shape
    two_hidden = w1.shape[1]
    hidden = two_hidden // 2
    assert w1.shape == (dim, two_hidden)
    assert b1.shape == (1, two_hidden)
    assert w2.shape == (hidden, dim)
    assert b2.shape == (1, dim)

    # --- M tiling: clamp to the (8-aligned) row count, pad rows if needed. ---
    tile_m = max(8, min(_round_up(tile_m, 8), _round_up(N, 8)))
    Np = _round_up(N, tile_m)
    if Np != N:
        x2d = jnp.pad(x2d, ((0, Np - N), (0, 0)))

    # --- hidden chunking: tile_h must be a lane-aligned divisor of hidden, else full. ---
    if tile_h >= hidden or hidden % tile_h != 0 or tile_h % 128 != 0:
        tile_h = hidden

    # Split W1/b1 into the GEGLU "a" half and "gate" half (wrapper-side, plain XLA ops).
    w1a, w1g = w1[:, :hidden], w1[:, hidden:]
    b1a, b1g = b1[:, :hidden], b1[:, hidden:]

    grid = (Np // tile_m, hidden // tile_h)

    # Explicit scoped-VMEM budget: 2x (double-buffered blocks) + f32 accumulator + margin.
    isz_x = jnp.dtype(x2d.dtype).itemsize
    isz_w = jnp.dtype(w1.dtype).itemsize
    blk_bytes = (tile_m * dim * isz_x            # x tile
                 + 2 * dim * tile_h * isz_w      # w1a + w1g chunks
                 + 2 * tile_h * isz_w            # b1a + b1g chunks
                 + tile_h * dim * isz_w          # w2 chunk
                 + dim * isz_w                   # b2
                 + tile_m * dim * isz_x)         # out tile
    vmem_bytes = 2 * blk_bytes + tile_m * dim * 4
    vmem_limit = int(min(max(vmem_bytes * 3 // 2 + (2 << 20), 32 << 20), 64 << 20))

    out = pl.pallas_call(
        _ff_kernel,
        out_shape=jax.ShapeDtypeStruct((Np, dim), x2d.dtype),
        grid_spec=pltpu.PrefetchScalarGridSpec(
            num_scalar_prefetch=0,
            grid=grid,
            in_specs=[
                pl.BlockSpec((tile_m, dim), lambda i, h: (i, 0)),    # x tile
                pl.BlockSpec((dim, tile_h), lambda i, h: (0, h)),    # W1 a-half chunk
                pl.BlockSpec((dim, tile_h), lambda i, h: (0, h)),    # W1 gate-half chunk
                pl.BlockSpec((1, tile_h), lambda i, h: (0, h)),      # b1 a-half chunk
                pl.BlockSpec((1, tile_h), lambda i, h: (0, h)),      # b1 gate-half chunk
                pl.BlockSpec((tile_h, dim), lambda i, h: (h, 0)),    # W2 row chunk
                pl.BlockSpec((1, dim), lambda i, h: (0, 0)),         # b2
            ],
            out_specs=pl.BlockSpec((tile_m, dim), lambda i, h: (i, 0)),
            scratch_shapes=[pltpu.VMEM((tile_m, dim), jnp.float32)],
        ),
        compiler_params=pltpu.CompilerParams(
            dimension_semantics=("parallel", "arbitrary"),
            vmem_limit_bytes=vmem_limit,
        ),
    )(x2d, w1a, w1g, b1a, b1g, w2, b2)

    return out[:N]


def feedforward_module(x_bsd, params, **kw):
    """x_bsd: [B, S, dim] like the PyTorch module's typical token input."""
    B, S, dim = x_bsd.shape
    y2d = feedforward(x_bsd.reshape(B * S, dim), *params, **kw)
    return y2d.reshape(B, S, dim)


def _ref_feedforward(x_bsd, params):
    w1, b1, w2, b2 = params
    h = x_bsd @ w1 + b1[0]
    hidden = w2.shape[0]
    a, g = h[..., :hidden], h[..., hidden:]
    y = a * _gelu_exact(g)
    return y @ w2 + b2[0]


def _init_params(key, dim, mult, dtype=jnp.float32):
    hidden = dim * mult
    kw1, kb1, kw2, kb2 = jax.random.split(key, 4)
    w1 = jax.random.normal(kw1, (dim, 2 * hidden), dtype) * (1.0 / math.sqrt(dim))
    b1 = jax.random.normal(kb1, (1, 2 * hidden), dtype) * 0.02
    w2 = jax.random.normal(kw2, (hidden, dim), dtype) * (1.0 / math.sqrt(hidden))
    b2 = jax.random.normal(kb2, (1, dim), dtype) * 0.02
    return w1, b1, w2, b2


if __name__ == "__main__":
    key = jax.random.PRNGKey(0)

    # --- Case 1: small shapes implied by the module (dim=32, mult=4). ---
    # Note: dim=32 is lane-sparse; production use should pad dim to a multiple of 128.
    B, S, dim, mult = 2, 8, 32, 4
    k1, k2, key = jax.random.split(key, 3)
    x = jax.random.normal(k1, (B, S, dim), dtype=jnp.float32)
    params = _init_params(k2, dim, mult)

    out = jax.block_until_ready(feedforward_module(x, params))
    ref = _ref_feedforward(x, params)
    assert out.shape == (B, S, dim)
    err = float(jnp.max(jnp.abs(out - ref)))
    assert jnp.allclose(out, ref, atol=1e-4, rtol=1e-4), err

    # --- Case 2: exercises multiple M tiles, row padding, and hidden chunking. ---
    B2, S2, dim2, mult2 = 2, 150, 128, 4          # N = 300 -> padded to tile_m
    k1, k2, key = jax.random.split(key, 3)
    x2 = jax.random.normal(k1, (B2, S2, dim2), dtype=jnp.float32)
    params2 = _init_params(k2, dim2, mult2)

    out2 = jax.block_until_ready(
        feedforward_module(x2, params2, tile_m=256, tile_h=256))
    ref2 = _ref_feedforward(x2, params2)
    err2 = float(jnp.max(jnp.abs(out2 - ref2)))
    assert out2.shape == (B2, S2, dim2)
    assert jnp.allclose(out2, ref2, atol=2e-4, rtol=2e-4), err2

    print("KERNEL_OK")
</pallas_src>

<mosaic_0001>
module attributes {stable_mosaic.version = 11 : i64} {
  func.func @_ff_kernel(%arg0: i32, %arg1: i32, %arg2: memref<16x32xf32, #tpu.memory_space<vmem>>, %arg3: memref<32x128xf32, #tpu.memory_space<vmem>>, %arg4: memref<32x128xf32, #tpu.memory_space<vmem>>, %arg5: memref<1x128xf32, #tpu.memory_space<vmem>>, %arg6: memref<1x128xf32, #tpu.memory_space<vmem>>, %arg7: memref<128x32xf32, #tpu.memory_space<vmem>>, %arg8: memref<1x32xf32, #tpu.memory_space<vmem>>, %arg9: memref<16x32xf32, #tpu.memory_space<vmem>>, %arg10: memref<16x32xf32, #tpu.memory_space<vmem>>) attributes {dimension_semantics = [#tpu.dimension_semantics<parallel>, #tpu.dimension_semantics<arbitrary>], iteration_bounds = array<i64: 1, 1>, scalar_prefetch = 0 : i64, scratch_operands = 1 : i64, tpu.core_type = #tpu.core_type<tc>, window_params = [{transform_indices = @transform_0, window_bounds = array<i64: 16, 32>}, {transform_indices = @transform_1, window_bounds = array<i64: 32, 128>}, {transform_indices = @transform_2, window_bounds = array<i64: 32, 128>}, {transform_indices = @transform_3, window_bounds = array<i64: 1, 128>}, {transform_indices = @transform_4, window_bounds = array<i64: 1, 128>}, {transform_indices = @transform_5, window_bounds = array<i64: 128, 32>}, {pipeline_mode = #tpu.pipeline_mode<synchronous>, transform_indices = @transform_6, window_bounds = array<i64: 1, 32>}, {transform_indices = @transform_7, window_bounds = array<i64: 16, 32>}]} {
    %c0_i32 = arith.constant 0 : i32
    %0 = arith.cmpi eq, %arg1, %c0_i32 : i32
    %1 = arith.extui %0 : i1 to i32
    %c0_i32_0 = arith.constant 0 : i32
    %2 = arith.cmpi ne, %1, %c0_i32_0 : i32
    scf.if %2 {
      %cst_23 = arith.constant 0.000000e+00 : f32
      %31 = vector.broadcast %cst_23 : f32 to vector<16x32xf32>
      %c0_24 = arith.constant 0 : index
      %c0_25 = arith.constant 0 : index
      %32 = vector.load %arg10[%c0_24, %c0_25] : memref<16x32xf32, #tpu.memory_space<vmem>>, vector<16x32xf32>
      tpu.vector_store %arg10[%c0_24, %c0_25], %31 {strides = array<i32>} : memref<16x32xf32, #tpu.memory_space<vmem>>, vector<16x32xf32>,
    } else {
    }
    %c0 = arith.constant 0 : index
    %c0_1 = arith.constant 0 : index
    %3 = vector.load %arg2[%c0, %c0_1] : memref<16x32xf32, #tpu.memory_space<vmem>>, vector<16x32xf32>
    %c0_2 = arith.constant 0 : index
    %c0_3 = arith.constant 0 : index
    %4 = vector.load %arg3[%c0_2, %c0_3] : memref<32x128xf32, #tpu.memory_space<vmem>>, vector<32x128xf32>
    %cst = arith.constant dense<0.000000e+00> : vector<16x128xf32>
    %5 = tpu.matmul %3, %4, %cst {dimension_numbers = #tpu.dot_dimension_numbers<[1], [0], [0], [1], [0, 0, 1, 1], [], []>} : vector<16x32xf32>, vector<32x128xf32>, vector<16x128xf32> -> vector<16x128xf32>
    %c0_4 = arith.constant 0 : index
    %c0_5 = arith.constant 0 : index
    %6 = vector.load %arg4[%c0_4, %c0_5] : memref<32x128xf32, #tpu.memory_space<vmem>>, vector<32x128xf32>
    %cst_6 = arith.constant dense<0.000000e+00> : vector<16x128xf32>
    %7 = tpu.matmul %3, %6, %cst_6 {dimension_numbers = #tpu.dot_dimension_numbers<[1], [0], [0], [1], [0, 0, 1, 1], [], []>} : vector<16x32xf32>, vector<32x128xf32>, vector<16x128xf32> -> vector<16x128xf32>
    %c0_7 = arith.constant 0 : index
    %c0_8 = arith.constant 0 : index
    %8 = vector.load %arg5[%c0_7, %c0_8] : memref<1x128xf32, #tpu.memory_space<vmem>>, vector<1x128xf32>
    %9 = vector.broadcast %8 : vector<1x128xf32> to vector<16x128xf32>
    %10 = arith.addf %5, %9 : vector<16x128xf32>
    %c0_9 = arith.constant 0 : index
    %c0_10 = arith.constant 0 : index
    %11 = vector.load %arg6[%c0_9, %c0_10] : memref<1x128xf32, #tpu.memory_space<vmem>>, vector<1x128xf32>
    %12 = vector.broadcast %11 : vector<1x128xf32> to vector<16x128xf32>
    %13 = arith.addf %7, %12 : vector<16x128xf32>
    %cst_11 = arith.constant 5.000000e-01 : f32
    %14 = vector.broadcast %cst_11 : f32 to vector<16x128xf32>
    %15 = arith.mulf %14, %13 : vector<16x128xf32>
    %cst_12 = arith.constant 0.707106769 : f32
    %16 = vector.broadcast %cst_12 : f32 to vector<16x128xf32>
    %17 = arith.mulf %13, %16 : vector<16x128xf32>
    %18 = math.erf %17 : vector<16x128xf32>
    %cst_13 = arith.constant 1.000000e+00 : f32
    %19 = vector.broadcast %cst_13 : f32 to vector<16x128xf32>
    %20 = arith.addf %19, %18 : vector<16x128xf32>
    %21 = arith.mulf %15, %20 : vector<16x128xf32>
    %22 = arith.mulf %10, %21 : vector<16x128xf32>
    %c0_14 = arith.constant 0 : index
    %c0_15 = arith.constant 0 : index
    %23 = vector.load %arg10[%c0_14, %c0_15] : memref<16x32xf32, #tpu.memory_space<vmem>>, vector<16x32xf32>
    %c0_16 = arith.constant 0 : index
    %c0_17 = arith.constant 0 : index
    %24 = vector.load %arg7[%c0_16, %c0_17] : memref<128x32xf32, #tpu.memory_space<vmem>>, vector<128x32xf32>
    %cst_18 = arith.constant dense<0.000000e+00> : vector<16x32xf32>
    %25 = tpu.matmul %22, %24, %cst_18 {dimension_numbers = #tpu.dot_dimension_numbers<[1], [0], [0], [1], [0, 0, 1, 1], [], []>} : vector<16x128xf32>, vector<128x32xf32>, vector<16x32xf32> -> vector<16x32xf32>
    %26 = arith.addf %23, %25 : vector<16x32xf32>
    %c0_19 = arith.constant 0 : index
    %c0_20 = arith.constant 0 : index
    %27 = vector.load %arg10[%c0_19, %c0_20] : memref<16x32xf32, #tpu.memory_space<vmem>>, vector<16x32xf32>
    tpu.vector_store %arg10[%c0_19, %c0_20], %26 {strides = array<i32>} : memref<16x32xf32, #tpu.memory_space<vmem>>, vector<16x32xf32>,
    %c0_i32_21 = arith.constant 0 : i32
    %28 = arith.cmpi eq, %arg1, %c0_i32_21 : i32
    %29 = arith.extui %28 : i1 to i32
    %c0_i32_22 = arith.constant 0 : i32
    %30 = arith.cmpi ne, %29, %c0_i32_22 : i32
    scf.if %30 {
      %c0_23 = arith.constant 0 : index
      %c0_24 = arith.constant 0 : index
      %31 = vector.load %arg10[%c0_23, %c0_24] : memref<16x32xf32, #tpu.memory_space<vmem>>, vector<16x32xf32>
      %c0_25 = arith.constant 0 : index
      %c0_26 = arith.constant 0 : index
      %32 = vector.load %arg8[%c0_25, %c0_26] : memref<1x32xf32, #tpu.memory_space<vmem>>, vector<1x32xf32>
      %33 = vector.broadcast %32 : vector<1x32xf32> to vector<16x32xf32>
      %34 = arith.addf %31, %33 : vector<16x32xf32>
      %c0_27 = arith.constant 0 : index
      %c0_28 = arith.constant 0 : index
      %35 = vector.load %arg9[%c0_27, %c0_28] : memref<16x32xf32, #tpu.memory_space<vmem>>, vector<16x32xf32>
      tpu.vector_store %arg9[%c0_27, %c0_28], %34 {strides = array<i32>} : memref<16x32xf32, #tpu.memory_space<vmem>>, vector<16x32xf32>,
    } else {
    }
    return
  }
  func.func @transform_0(%arg0: i32, %arg1: i32) -> (i32, i32) {
    %c0_i32 = arith.constant 0 : i32
    %c0_i32_0 = arith.constant 0 : i32
    return %arg0, %c0_i32 : i32, i32
  }
  func.func @transform_1(%arg0: i32, %arg1: i32) -> (i32, i32) {
    %c0_i32 = arith.constant 0 : i32
    %c0_i32_0 = arith.constant 0 : i32
    return %c0_i32, %arg1 : i32, i32
  }
  func.func @transform_2(%arg0: i32, %arg1: i32) -> (i32, i32) {
    %c0_i32 = arith.constant 0 : i32
    %c0_i32_0 = arith.constant 0 : i32
    return %c0_i32, %arg1 : i32, i32
  }
  func.func @transform_3(%arg0: i32, %arg1: i32) -> (i32, i32) {
    %c0_i32 = arith.constant 0 : i32
    %c0_i32_0 = arith.constant 0 : i32
    return %c0_i32, %arg1 : i32, i32
  }
  func.func @transform_4(%arg0: i32, %arg1: i32) -> (i32, i32) {
    %c0_i32 = arith.constant 0 : i32
    %c0_i32_0 = arith.constant 0 : i32
    return %c0_i32, %arg1 : i32, i32
  }
  func.func @transform_5(%arg0: i32, %arg1: i32) -> (i32, i32) {
    %c0_i32 = arith.constant 0 : i32
    %c0_i32_0 = arith.constant 0 : i32
    return %arg1, %c0_i32 : i32, i32
  }
  func.func @transform_6(%arg0: i32, %arg1: i32) -> (i32, i32) {
    %c0_i32 = arith.constant 0 : i32
    %c0_i32_0 = arith.constant 0 : i32
    %c0_i32_1 = arith.constant 0 : i32
    return %c0_i32, %c0_i32_0 : i32, i32
  }
  func.func @transform_7(%arg0: i32, %arg1: i32) -> (i32, i32) {
    %c0_i32 = arith.constant 0 : i32
    %c0_i32_0 = arith.constant 0 : i32
    return %arg0, %c0_i32 : i32, i32
  }
}

</mosaic_0001>

<llo_original>
// kernel: tpu_custom_call.1
$region0: #{tpu_custom_call.1}
  #allocation0 [shape = 'u32[]', space=smem, size = 0x4, offset = 0x4, fixed_abs, tag = 'smem constant byte address 0x4 - core index']
  #allocation1 [shape = 'u32[144,128]{1,0:T(1,128)}', space=vmem, size = 0x12000, scoped, tag = 'internal scratch']
  #allocation2 [shape = 'f32[16,32]{1,0:T(8,128)}', space=vmem, size = 0x2000, scoped, tag = 'scratch operand']
  %s0 = inlined_call_operand.vmem [shape: f32[16,32], index: 0, kind: input, shape index: {}]
  %s1 = inlined_call_operand.vmem [shape: f32[32,128], index: 1, kind: input, shape index: {}]
  %s2 = inlined_call_operand.vmem [shape: f32[32,128], index: 2, kind: input, shape index: {}]
  %s3 = inlined_call_operand.vmem [shape: f32[1,128], index: 3, kind: input, shape index: {}]
  %s4 = inlined_call_operand.vmem [shape: f32[1,128], index: 4, kind: input, shape index: {}]
  %s5 = inlined_call_operand.vmem [shape: f32[128,32], index: 5, kind: input, shape index: {}]
  %s6 = inlined_call_operand.vmem [shape: f32[1,32], index: 6, kind: input, shape index: {}]
  %s7 = inlined_call_operand.hbm [shape: f32[16,32], index: 7, kind: output, shape index: {}]
  %s8 = sld [smem:[#allocation0]]
  $region46: #{tpu_custom_call.1} parent=0
    _
  %s10 = ssub.s32 1, %s8
  %s11 = scalar_select 0, %s10, %s8
  $region1: #{tpu_custom_call.1} parent=0
    #allocation3 [shape = 'u8[8192]{0}', space=vmem, size = 0x2000, scoped, tag = 'output window, operand 0, single buffered']
    #allocation4 [shape = 's32[1]{0}', space=sflag, size = 0x4, scoped, tag = 'scoped memory for tpu_custom_call.1']
    %12 = vsyncpa [#allocation4], 0
    // Predicated region
    $region2: #{tpu_custom_call.1} parent=1 // pred_check
      _
    $region3: #{tpu_custom_call.1} parent=1 // pred_check_branch
      %14 = sbr.rel (0) target = $region5
    $region4: #{tpu_custom_call.1} parent=1 // pred_region
      _
    $region5: #{tpu_custom_call.1} parent=1 // pred_fallthru
      _
    // Predicated region
    $region6: #{tpu_custom_call.1} parent=1 // pred_check
      _
    $region7: #{tpu_custom_call.1} parent=1 // pred_check_branch
      %16 = sbr.rel (0) target = $region9
    $region8: #{tpu_custom_call.1} parent=1 // pred_region
      _
    $region9: #{tpu_custom_call.1} parent=1 // pred_fallthru
      _
    // Predicated region
    $region10: #{tpu_custom_call.1} parent=1 // pred_check
      _
    $region11: #{tpu_custom_call.1} parent=1 // pred_check_branch
      %18 = sbr.rel (0) target = $region13
    $region12: #{tpu_custom_call.1} parent=1 // pred_region
      _
    $region13: #{tpu_custom_call.1} parent=1 // pred_fallthru
      _
    // Predicated region
    $region14: #{tpu_custom_call.1} parent=1 // pred_check
      _
    $region15: #{tpu_custom_call.1} parent=1 // pred_check_branch
      %20 = sbr.rel (0) target = $region17
    $region16: #{tpu_custom_call.1} parent=1 // pred_region
      _
    $region17: #{tpu_custom_call.1} parent=1 // pred_fallthru
      _
    // Predicated region
    $region18: #{tpu_custom_call.1} parent=1 // pred_check
      _
    $region19: #{tpu_custom_call.1} parent=1 // pred_check_branch
      %22 = sbr.rel (0) target = $region21
    $region20: #{tpu_custom_call.1} parent=1 // pred_region
      _
    $region21: #{tpu_custom_call.1} parent=1 // pred_fallthru
      _
    // Predicated region
    $region22: #{tpu_custom_call.1} parent=1 // pred_check
      _
    $region23: #{tpu_custom_call.1} parent=1 // pred_check_branch
      %24 = sbr.rel (0) target = $region25
    $region24: #{tpu_custom_call.1} parent=1 // pred_region
      _
    $region25: #{tpu_custom_call.1} parent=1 // pred_fallthru
      _
    // Predicated region
    $region26: #{tpu_custom_call.1} parent=1 // pred_check
      _
    $region27: #{tpu_custom_call.1} parent=1 // pred_check_branch
      %26 = sbr.rel (0) target = $region29
    $region28: #{tpu_custom_call.1} parent=1 // pred_region
      _
    $region29: #{tpu_custom_call.1} parent=1 // pred_fallthru
      _
    %p27 = scmp.eq.s32.totalorder 0, 0
    // Predicated region
    $region30: #{tpu_custom_call.1} parent=1 // pred_check
      %p28 = pneg %p27
    $region31: #{tpu_custom_call.1} parent=1 // pred_check_branch
      %30 = sbr.rel (%p28) target = $region33
    $region32: #{tpu_custom_call.1} parent=1 // pred_region
      %vm31 = vcmask 261120
      %32 = vst.msk [vmem:[#allocation2] sm:$0xff] %vm31, 0.0
      %33 = vst.msk [vmem:[#allocation2 + $0x8] sm:$0xff] %vm31, 0.0
    $region33: #{tpu_custom_call.1} parent=1 // pred_fallthru
      _
    %v34 = vld [vmem:[%s0] sm:$0xff]
    %v35 = vld [vmem:[%s0 + $0x8] sm:$0xff]
    %v36 = vld [vmem:[%s1] sm:$0xff]
    %v37 = vld [vmem:[%s1 + $0x8] sm:$0xff]
    %v38 = vld [vmem:[%s1 + $0x10] sm:$0xff]
    %v39 = vld [vmem:[%s1 + $0x18] sm:$0xff]
    %v40 = vld [vmem:[%s2] sm:$0xff]
    %v41 = vld [vmem:[%s2 + $0x8] sm:$0xff]
    %v42 = vld [vmem:[%s2 + $0x10] sm:$0xff]
    %v43 = vld [vmem:[%s2 + $0x18] sm:$0xff]
    %v44 = vld [vmem:[%s3] sm:$0x1]
    %v46 = vlaneseq
    %v47 = vshrl.u32 %v46, 7
    %v48 = vsub.s32 0, %v47
    %v49 = vrot.slane %v44, %v48
    %vm51 = vcmask 261120
    %v53 = vsel %vm51, %v34, 0
    %v56 = vsel %vm51, %v35, 0
    %58 = vmatprep.subr.mxu0 0.0
    %59 = vmatpush1.msra.mxu0 %v36
    %60 = vmatprep.subr.mxu0 0.0
    %61 = vmatpush1.msra.mxu0 %v37
    %62 = vmatprep.subr.mxu0 0.0
    %63 = vmatpush1.msra.mxu0 %v38
    %64 = vmatprep.subr.mxu0 0.0
    %65 = vmatpush1.msra.mxu0 %v39
    %66 = vmatprep.subr.mxu0 0.0
    %67 = vmatpush1.msra.mxu0 0.0
    %68 = vmatprep.subr.mxu0 0.0
    %69 = vmatpush1.msra.mxu0 0.0
    %70 = vmatprep.subr.mxu0 0.0
    %71 = vmatpush1.msra.mxu0 0.0
    %72 = vmatprep.subr.mxu0 0.0
    %73 = vmatpush1.msra.mxu0 0.0
    %74 = vmatprep.subr.mxu0 0.0
    %75 = vmatpush1.msra.mxu0 0.0
    %76 = vmatprep.subr.mxu0 0.0
    %77 = vmatpush1.msra.mxu0 0.0
    %78 = vmatprep.subr.mxu0 0.0
    %79 = vmatpush1.msra.mxu0 0.0
    %80 = vmatprep.subr.mxu0 0.0
    %81 = vmatpush1.msra.mxu0 0.0
    %82 = vmatprep.subr.mxu0 0.0
    %83 = vmatpush1.msra.mxu0 0.0
    %84 = vmatprep.subr.mxu0 0.0
    %85 = vmatpush1.msra.mxu0 0.0
    %86 = vmatprep.subr.mxu0 0.0
    %87 = vmatpush1.msra.mxu0 0.0
    %88 = vmatprep.subr.mxu0 0.0
    %89 = vmatpush1.msra.mxu0 0.0
    %90 = vmatprep.subr.mxu0 0.0
    %91 = vmatpush1.msra.mxu0 0.0
    %92 = vmatprep.subr.mxu0 0.0
    %93 = vmatpush1.msra.mxu0 0.0
    %94 = vmatprep.subr.mxu0 0.0
    %95 = vmatpush1.msra.mxu0 0.0
    %96 = vmatprep.subr.mxu0 0.0
    %97 = vmatpush1.msra.mxu0 0.0
    %98 = vmatprep.subr.mxu0 0.0
    %99 = vmatpush1.msra.mxu0 0.0
    %100 = vmatprep.subr.mxu0 0.0
    %101 = vmatpush1.msra.mxu0 0.0
    %102 = vmatprep.subr.mxu0 0.0
    %103 = vmatpush1.msra.mxu0 0.0
    %104 = vmatprep.subr.mxu0 0.0
    %105 = vmatpush1.msra.mxu0 0.0
    %106 = vmatprep.subr.mxu0 0.0
    %107 = vmatpush1.msra.mxu0 0.0
    %108 = vmatprep.subr.mxu0 0.0
    %109 = vmatpush1.msra.mxu0 0.0
    %110 = vmatprep.subr.mxu0 0.0
    %111 = vmatpush1.msra.mxu0 0.0
    %112 = vmatprep.subr.mxu0 0.0
    %113 = vmatpush1.msra.mxu0 0.0
    %114 = vmatprep.subr.mxu0 0.0
    %115 = vmatpush1.msra.mxu0 0.0
    %116 = vmatprep.subr.mxu0 0.0
    %117 = vmatpush1.msra.mxu0 0.0
    %118 = vmatprep.subr.mxu0 0.0
    %119 = vmatpush1.msra.mxu0 0.0
    %120 = vmatprep.subr.mxu0 0.0
    %121 = vmatpush1.msra.mxu0 0.0
    %122 = vmatprep.mubr.f32.mxu0 0.0
    %123 = vmatmul.mubr.f32.gmra.mrb[0].mxu0 %v53
    %v124 = vpop.f32.mrb[0].mxu0
    %v125 = vadd.f32 %v49, %v124
    %v126 = vpop.f32.mrb[0].mxu0
    %127 = vmatprep.mubr.f32.mxu0 0.0
    %128 = vmatmul.mubr.f32.gmra.mrb[0].mxu0 %v56
    %v129 = vpop.f32.mrb[0].mxu0
    %v130 = vadd.f32 %v49, %v129
    %v131 = vpop.f32.mrb[0].mxu0
    %132 = vdwg.mxu0
    %v133 = vld [vmem:[%s4] sm:$0x1]
    %v135 = vlaneseq
    %v136 = vshrl.u32 %v135, 7
    %v137 = vsub.s32 0, %v136
    %v138 = vrot.slane %v133, %v137
    %140 = vmatprep.subr.mxu0 0.0
    %141 = vmatpush1.msra.mxu0 %v40
    %142 = vmatprep.subr.mxu0 0.0
    %143 = vmatpush1.msra.mxu0 %v41
    %144 = vmatprep.subr.mxu0 0.0
    %145 = vmatpush1.msra.mxu0 %v42
    %146 = vmatprep.subr.mxu0 0.0
    %147 = vmatpush1.msra.mxu0 %v43
    %148 = vmatprep.subr.mxu0 0.0
    %149 = vmatpush1.msra.mxu0 0.0
    %150 = vmatprep.subr.mxu0 0.0
    %151 = vmatpush1.msra.mxu0 0.0
    %152 = vmatprep.subr.mxu0 0.0
    %153 = vmatpush1.msra.mxu0 0.0
    %154 = vmatprep.subr.mxu0 0.0
    %155 = vmatpush1.msra.mxu0 0.0
    %156 = vmatprep.subr.mxu0 0.0
    %157 = vmatpush1.msra.mxu0 0.0
    %158 = vmatprep.subr.mxu0 0.0
    %159 = vmatpush1.msra.mxu0 0.0
    %160 = vmatprep.subr.mxu0 0.0
    %161 = vmatpush1.msra.mxu0 0.0
    %162 = vmatprep.subr.mxu0 0.0
    %163 = vmatpush1.msra.mxu0 0.0
    %164 = vmatprep.subr.mxu0 0.0
    %165 = vmatpush1.msra.mxu0 0.0
    %166 = vmatprep.subr.mxu0 0.0
    %167 = vmatpush1.msra.mxu0 0.0
    %168 = vmatprep.subr.mxu0 0.0
    %169 = vmatpush1.msra.mxu0 0.0
    %170 = vmatprep.subr.mxu0 0.0
    %171 = vmatpush1.msra.mxu0 0.0
    %172 = vmatprep.subr.mxu0 0.0
    %173 = vmatpush1.msra.mxu0 0.0
    %174 = vmatprep.subr.mxu0 0.0
    %175 = vmatpush1.msra.mxu0 0.0
    %176 = vmatprep.subr.mxu0 0.0
    %177 = vmatpush1.msra.mxu0 0.0
    %178 = vmatprep.subr.mxu0 0.0
    %179 = vmatpush1.msra.mxu0 0.0
    %180 = vmatprep.subr.mxu0 0.0
    %181 = vmatpush1.msra.mxu0 0.0
    %182 = vmatprep.subr.mxu0 0.0
    %183 = vmatpush1.msra.mxu0 0.0
    %184 = vmatprep.subr.mxu0 0.0
    %185 = vmatpush1.msra.mxu0 0.0
    %186 = vmatprep.subr.mxu0 0.0
    %187 = vmatpush1.msra.mxu0 0.0
    %188 = vmatprep.subr.mxu0 0.0
    %189 = vmatpush1.msra.mxu0 0.0
    %190 = vmatprep.subr.mxu0 0.0
    %191 = vmatpush1.msra.mxu0 0.0
    %192 = vmatprep.subr.mxu0 0.0
    %193 = vmatpush1.msra.mxu0 0.0
    %194 = vmatprep.subr.mxu0 0.0
    %195 = vmatpush1.msra.mxu0 0.0
    %196 = vmatprep.subr.mxu0 0.0
    %197 = vmatpush1.msra.mxu0 0.0
    %198 = vmatprep.subr.mxu0 0.0
    %199 = vmatpush1.msra.mxu0 0.0
    %200 = vmatprep.subr.mxu0 0.0
    %201 = vmatpush1.msra.mxu0 0.0
    %202 = vmatprep.subr.mxu0 0.0
    %203 = vmatpush1.msra.mxu0 0.0
    %204 = vmatprep.mubr.f32.mxu0 0.0
    %205 = vmatmul.mubr.f32.gmra.mrb[0].mxu0 %v53
    %v206 = vpop.f32.mrb[0].mxu0
    %v207 = vadd.f32 %v138, %v206
    %v208 = vpop.f32.mrb[0].mxu0
    %209 = vmatprep.mubr.f32.mxu0 0.0
    %210 = vmatmul.mubr.f32.gmra.mrb[0].mxu0 %v56
    %v211 = vpop.f32.mrb[0].mxu0
    %v212 = vadd.f32 %v138, %v211
    %v213 = vpop.f32.mrb[0].mxu0
    %214 = vdwg.mxu0
    %v215 = vmul.f32 %v207, 0.5
    %v216 = vmul.f32 %v212, 0.5
    %v217 = vmul.f32 %v207, 0.70710677
    %v218 = vmul.f32 %v212, 0.70710677
    %v219 = verf.f32.pop %v217
    %v220 = verf.f32.pop %v218
    %v221 = vadd.f32 %v219, 1.0
    %v222 = vadd.f32 %v220, 1.0
    %v223 = vmul.f32 %v215, %v221
    %v224 = vmul.f32 %v216, %v222
    %v225 = vmul.f32 %v125, %v223
    %v226 = vmul.f32 %v130, %v224
    %v227 = vld [vmem:[#allocation2] sm:$0xff]
    %v228 = vld [vmem:[#allocation2 + $0x8] sm:$0xff]
    %v229 = vld [vmem:[%s5] sm:$0xff]
    %v230 = vld [vmem:[%s5 + $0x8] sm:$0xff]
    %v231 = vld [vmem:[%s5 + $0x10] sm:$0xff]
    %v232 = vld [vmem:[%s5 + $0x18] sm:$0xff]
    %v233 = vld [vmem:[%s5 + $0x20] sm:$0xff]
    %v234 = vld [vmem:[%s5 + $0x28] sm:$0xff]
    %v235 = vld [vmem:[%s5 + $0x30] sm:$0xff]
    %v236 = vld [vmem:[%s5 + $0x38] sm:$0xff]
    %v237 = vld [vmem:[%s5 + $0x40] sm:$0xff]
    %v238 = vld [vmem:[%s5 + $0x48] sm:$0xff]
    %v239 = vld [vmem:[%s5 + $0x50] sm:$0xff]
    %v240 = vld [vmem:[%s5 + $0x58] sm:$0xff]
    %v241 = vld [vmem:[%s5 + $0x60] sm:$0xff]
    %v242 = vld [vmem:[%s5 + $0x68] sm:$0xff]
    %v243 = vld [vmem:[%s5 + $0x70] sm:$0xff]
    %v244 = vld [vmem:[%s5 + $0x78] sm:$0xff]
    %245 = vmatprep.subr.mxu0 0.0
    %246 = vmatpush1.msra.mxu0 %v229
    %247 = vmatprep.subr.mxu0 0.0
    %248 = vmatpush1.msra.mxu0 %v230
    %249 = vmatprep.subr.mxu0 0.0
    %250 = vmatpush1.msra.mxu0 %v231
    %251 = vmatprep.subr.mxu0 0.0
    %252 = vmatpush1.msra.mxu0 %v232
    %253 = vmatprep.subr.mxu0 0.0
    %254 = vmatpush1.msra.mxu0 %v233
    %255 = vmatprep.subr.mxu0 0.0
    %256 = vmatpush1.msra.mxu0 %v234
    %257 = vmatprep.subr.mxu0 0.0
    %258 = vmatpush1.msra.mxu0 %v235
    %259 = vmatprep.subr.mxu0 0.0
    %260 = vmatpush1.msra.mxu0 %v236
    %261 = vmatprep.subr.mxu0 0.0
    %262 = vmatpush1.msra.mxu0 %v237
    %263 = vmatprep.subr.mxu0 0.0
    %264 = vmatpush1.msra.mxu0 %v238
    %265 = vmatprep.subr.mxu0 0.0
    %266 = vmatpush1.msra.mxu0 %v239
    %267 = vmatprep.subr.mxu0 0.0
    %268 = vmatpush1.msra.mxu0 %v240
    %269 = vmatprep.subr.mxu0 0.0
    %270 = vmatpush1.msra.mxu0 %v241
    %271 = vmatprep.subr.mxu0 0.0
    %272 = vmatpush1.msra.mxu0 %v242
    %273 = vmatprep.subr.mxu0 0.0
    %274 = vmatpush1.msra.mxu0 %v243
    %275 = vmatprep.subr.mxu0 0.0
    %276 = vmatpush1.msra.mxu0 %v244
    %277 = vmatprep.subr.mxu0 0.0
    %278 = vmatpush1.msra.mxu0 0.0
    %279 = vmatprep.subr.mxu0 0.0
    %280 = vmatpush1.msra.mxu0 0.0
    %281 = vmatprep.subr.mxu0 0.0
    %282 = vmatpush1.msra.mxu0 0.0
    %283 = vmatprep.subr.mxu0 0.0
    %284 = vmatpush1.msra.mxu0 0.0
    %285 = vmatprep.subr.mxu0 0.0
    %286 = vmatpush1.msra.mxu0 0.0
    %287 = vmatprep.subr.mxu0 0.0
    %288 = vmatpush1.msra.mxu0 0.0
    %289 = vmatprep.subr.mxu0 0.0
    %290 = vmatpush1.msra.mxu0 0.0
    %291 = vmatprep.subr.mxu0 0.0
    %292 = vmatpush1.msra.mxu0 0.0
    %293 = vmatprep.subr.mxu0 0.0
    %294 = vmatpush1.msra.mxu0 0.0
    %295 = vmatprep.subr.mxu0 0.0
    %296 = vmatpush1.msra.mxu0 0.0
    %297 = vmatprep.subr.mxu0 0.0
    %298 = vmatpush1.msra.mxu0 0.0
    %299 = vmatprep.subr.mxu0 0.0
    %300 = vmatpush1.msra.mxu0 0.0
    %301 = vmatprep.subr.mxu0 0.0
    %302 = vmatpush1.msra.mxu0 0.0
    %303 = vmatprep.subr.mxu0 0.0
    %304 = vmatpush1.msra.mxu0 0.0
    %305 = vmatprep.subr.mxu0 0.0
    %306 = vmatpush1.msra.mxu0 0.0
    %307 = vmatprep.subr.mxu0 0.0
    %308 = vmatpush1.msra.mxu0 0.0
    %309 = vmatprep.mubr.f32.mxu0 0.0
    %310 = vmatmul.mubr.f32.gmra.mrb[0].mxu0 %v225
    %v311 = vpop.f32.mrb[0].mxu0
    %v312 = vadd.f32 0.0, %v311
    %v313 = vpop.f32.mrb[0].mxu0
    %314 = vmatprep.mubr.f32.mxu0 0.0
    %315 = vmatmul.mubr.f32.gmra.mrb[0].mxu0 %v226
    %v316 = vpop.f32.mrb[0].mxu0
    %v317 = vadd.f32 0.0, %v316
    %v318 = vpop.f32.mrb[0].mxu0
    %319 = vdwg.mxu0
    %v320 = vadd.f32 %v227, %v312
    %v321 = vadd.f32 %v228, %v317
    %322 = vst.msk [vmem:[#allocation2] sm:$0xff] %vm51, %v320
    %323 = vst.msk [vmem:[#allocation2 + $0x8] sm:$0xff] %vm51, %v321
    // Predicated region
    $region34: #{tpu_custom_call.1} parent=1 // pred_check
      %p324 = pneg %p27
    $region35: #{tpu_custom_call.1} parent=1 // pred_check_branch
      %326 = sbr.rel (%p324) target = $region37
    $region36: #{tpu_custom_call.1} parent=1 // pred_region
      %v327 = vld [vmem:[#allocation2] sm:$0xff]
      %v328 = vld [vmem:[#allocation2 + $0x8] sm:$0xff]
      %v329 = vld [vmem:[%s6] sm:$0x1]
      %v331 = vlaneseq
      %v332 = vshrl.u32 %v331, 7
      %v333 = vsub.s32 0, %v332
      %v334 = vrot.slane %v329, %v333
      %v336 = vadd.f32 %v327, %v334
      %v337 = vadd.f32 %v328, %v334
      %338 = vst.msk [vmem:[#allocation3] sm:$0xff] %vm51, %v336
      %339 = vst.msk [vmem:[#allocation3 + $0x8] sm:$0xff] %vm51, %v337
    $region37: #{tpu_custom_call.1} parent=1 // pred_fallthru
      _
    // Predicated region
    $region38: #{tpu_custom_call.1} parent=1 // pred_check
      _
    $region39: #{tpu_custom_call.1} parent=1 // pred_check_branch
      %341 = sbr.rel (0) target = $region41
    $region40: #{tpu_custom_call.1} parent=1 // pred_region
      %s343 = ssub.s32 256, 256
      %344 = vsyncadd [#allocation4], %s343
      %s345 = sshll.u32 [#allocation3], 4
      %s346 = int_to_ptr.vmem [resolvable:$true] %s345
      %351 = dma.vmem_to_hbm [thread:$0]  %s346, 256, %s7, [#allocation4], 128, 128, 8
    $region41: #{tpu_custom_call.1} parent=1 // pred_fallthru
      _
    // Predicated region
    $region42: #{tpu_custom_call.1} parent=1 // pred_check
      _
    $region43: #{tpu_custom_call.1} parent=1 // pred_check_branch
      %353 = sbr.rel (0) target = $region45
    $region44: #{tpu_custom_call.1} parent=1 // pred_region
      %354 = dma.done [#allocation4], 256
    $region45: #{tpu_custom_call.1} parent=1 // pred_fallthru
      _
    %355 = vsyncpa [#allocation4], 1

</llo_original>
